<compile_context>
chip_gen: v6e
topology: v6e:2x2x1
jax: 0.10.0
libtpu: 0.0.40
codegen_flags: <defaults>
</compile_context>

<pallas_src>
import functools

import jax
import jax.numpy as jnp
from jax.experimental import pallas as pl
from jax.experimental.pallas import tpu as pltpu


def _round_up(v, m):
    return ((v + m - 1) // m) * m


def filmnet_fused_kernel(x_ref, cond_ref, w0_ref, wgb_ref, w1_ref, w2_ref,
                         b0_ref, bgb_ref, b1_ref, b2_ref, out_ref, *,
                         feat, gamma_width):
    # ---- packed layer 0: h = x @ W0 + b0 (lane-dense, K = P*input_dim) ----
    h = jnp.dot(x_ref[...], w0_ref[...],
                preferred_element_type=jnp.float32) + b0_ref[...]

    # ---- FiLM: one fused [gamma | beta] projection on packed cond rows ----
    gb = jnp.dot(cond_ref[...], wgb_ref[...],
                 preferred_element_type=jnp.float32) + bgb_ref[...]
    gamma = gb[:, :gamma_width]          # lane offset 0 (aligned)
    beta = gb[:, gamma_width:]           # lane offset P*H (128-aligned)

    # h = relu(gamma * h + beta)
    h = jnp.maximum(gamma * h + beta, 0.0)

    # middle hidden layer (hidden_layers=2 -> exactly one middle layer)
    h = jnp.maximum(
        jnp.dot(h, w1_ref[...], preferred_element_type=jnp.float32)
        + b1_ref[...], 0.0)

    # output projection -> packed logits (TBP, P*S*F)
    logits = (jnp.dot(h, w2_ref[...], preferred_element_type=jnp.float32)
              + b2_ref[...])

    # ---- vectorized segmented softmax over contiguous groups of F lanes ---
    n = logits.shape[-1]
    lane = jax.lax.broadcasted_iota(jnp.int32, (1, n), 1) % feat

    # Exact per-group max, broadcast to every lane of its group, via masked
    # XLU rolls (groups never cross the 128-lane packing boundary because
    # each packed batch row is a whole number of groups).
    m = logits
    for k in range(1, feat):
        fwd = pltpu.roll(logits, shift=k, axis=1)       # logits[:, j-k]
        bwd = pltpu.roll(logits, shift=n - k, axis=1)   # logits[:, j+k]
        m = jnp.where(lane >= k, jnp.maximum(m, fwd), m)
        m = jnp.where(lane < feat - k, jnp.maximum(m, bwd), m)

    e = jnp.exp(logits - m)               # single full-width EUP pass

    # Exact per-group sum via the same masked-roll pattern (plain f32 adds,
    # matches the jnp.sum reference; kept off the MXU on purpose).
    denom = e
    for k in range(1, feat):
        fwd = pltpu.roll(e, shift=k, axis=1)
        bwd = pltpu.roll(e, shift=n - k, axis=1)
        denom = denom + jnp.where(lane >= k, fwd, 0.0)
        denom = denom + jnp.where(lane < feat - k, bwd, 0.0)

    # single lane-dense (unmasked) store of the final result
    out_ref[...] = e / denom


def filmnet_forward(x, t, y, params, *, batch_tile=None):
    """Pallas implementation of FiLMNet.forward(x, t, y) (hidden_layers=2)."""
    x_shape = x.shape
    B, S, F = x_shape
    input_dim = S * F

    (w0, b0, wg, bg, wb, bb, w1, b1, w2, b2) = params
    H = w0.shape[1]
    out_dim = w2.shape[1]
    cond_dim = y.shape[1]
    assert out_dim == input_dim, "output_dim must equal S*F for h.view(*x_shape)"

    # Lane-packing factor: pack P batch rows per 128-lane row.
    P = max(1, 128 // max(input_dim, H, out_dim))

    x_flat = x.reshape(B, -1).astype(jnp.float32)
    cond = jnp.concatenate(
        [y.astype(jnp.float32), t.astype(jnp.float32)[:, None]], axis=1)

    # Zero-pad batch to a multiple of P (padded rows give uniform softmax,
    # never NaN; they are sliced away below).
    Bpad = _round_up(B, P)
    if Bpad != B:
        pad = Bpad - B
        x_flat = jnp.concatenate(
            [x_flat, jnp.zeros((pad, input_dim), jnp.float32)], axis=0)
        cond = jnp.concatenate(
            [cond, jnp.zeros((pad, cond_dim + 1), jnp.float32)], axis=0)
    Bp = Bpad // P

    # Packed (lane-dense) activations: contiguous, free reshapes.
    x_packed = x_flat.reshape(Bp, P * input_dim)
    cond_packed = cond.reshape(Bp, P * (cond_dim + 1))

    # Block-diagonal packed weights (one-time wrapper-side transforms).
    eyeP = jnp.eye(P, dtype=jnp.float32)
    w0_bd = jnp.kron(eyeP, w0)                               # (P*in,  P*H)
    wgb_bd = jnp.concatenate(
        [jnp.kron(eyeP, wg), jnp.kron(eyeP, wb)], axis=1)    # (P*(c+1), 2*P*H)
    w1_bd = jnp.kron(eyeP, w1)                               # (P*H,   P*H)
    w2_bd = jnp.kron(eyeP, w2)                               # (P*H,   P*out)
    b0_p = jnp.tile(b0, (1, P))                              # (1, P*H)
    bgb_p = jnp.concatenate(
        [jnp.tile(bg, (1, P)), jnp.tile(bb, (1, P))], axis=1)  # (1, 2*P*H)
    b1_p = jnp.tile(b1, (1, P))                              # (1, P*H)
    b2_p = jnp.tile(b2, (1, P))                              # (1, P*out)

    # Batch tile (in packed rows).  2048 packed rows ~ 8192 batch rows and
    # only a few MB of double-buffered VMEM -> no vmem_limit bump needed.
    if batch_tile is None:
        cap = 2048
        if Bp > cap:
            batch_tile = cap
        elif Bp >= 16:
            # keep >=2 grid steps so v7x's two TensorCores both get work
            batch_tile = min(cap, _round_up(pl.cdiv(Bp, 2), 8))
        else:
            batch_tile = Bp
    TBP = batch_tile
    grid = (pl.cdiv(Bp, TBP),)

    row = lambda cols: pl.BlockSpec((TBP, cols), lambda i: (i, 0))
    res = lambda arr: pl.BlockSpec(arr.shape, lambda i: (0, 0))

    kernel = functools.partial(filmnet_fused_kernel, feat=F, gamma_width=P * H)

    out_packed = pl.pallas_call(
        kernel,
        out_shape=jax.ShapeDtypeStruct((Bp, P * out_dim), jnp.float32),
        grid=grid,
        in_specs=[
            row(P * input_dim),           # x_packed    (tiled on packed B)
            row(P * (cond_dim + 1)),      # cond_packed (tiled on packed B)
            res(w0_bd),                   # weights: VMEM-resident
            res(wgb_bd),
            res(w1_bd),
            res(w2_bd),
            res(b0_p),                    # biases: separate resident refs
            res(bgb_p),
            res(b1_p),
            res(b2_p),
        ],
        out_specs=row(P * out_dim),
        compiler_params=pltpu.CompilerParams(
            dimension_semantics=("parallel",)),
    )(x_packed, cond_packed, w0_bd, wgb_bd, w1_bd, w2_bd,
      b0_p, bgb_p, b1_p, b2_p)

    # Unpack: free, contiguous reshapes + a slice to drop padded rows.
    out = out_packed.reshape(Bpad, out_dim)[:B].reshape(x_shape)
    return out


def init_linear(key, fan_in, fan_out):
    """Deterministic init matching nn.Linear's U(-1/sqrt(fan_in), ...)."""
    kw, kb = jax.random.split(key)
    bound = 1.0 / float(fan_in) ** 0.5
    w = jax.random.uniform(kw, (fan_in, fan_out), jnp.float32, -bound, bound)
    b = jax.random.uniform(kb, (1, fan_out), jnp.float32, -bound, bound)
    return w, b


def reference_forward(x, t, y, params):
    """Pure-JAX reference for correctness check."""
    (w0, b0, wg, bg, wb, bb, w1, b1, w2, b2) = params
    x_shape = x.shape
    h = x.reshape(x_shape[0], -1) @ w0 + b0
    cond = jnp.concatenate([y, t[:, None]], axis=1)
    gamma = cond @ wg + bg
    beta = cond @ wb + bb
    h = jax.nn.relu(gamma * h + beta)
    h = jax.nn.relu(h @ w1 + b1)
    h = h @ w2 + b2
    h = h.reshape(x_shape)
    return jax.nn.softmax(h, axis=-1)


if __name__ == "__main__":
    key = jax.random.PRNGKey(0)

    # Small shapes consistent with the module: x is (B, S, F), and
    # input_dim = output_dim = S * F (required by h.view(*x_shape)).
    B, S, F = 8, 8, 4
    input_dim = S * F          # 32
    hidden_dim = 32
    output_dim = input_dim     # must equal input_dim for the final view
    condition_dim = 8
    # hidden_layers = 2 -> layers: [Lin(in,hid), Lin(hid,hid), Lin(hid,out)]

    keys = jax.random.split(key, 8)
    w0, b0 = init_linear(keys[0], input_dim, hidden_dim)
    wg, bg = init_linear(keys[1], condition_dim + 1, hidden_dim)
    wb, bb = init_linear(keys[2], condition_dim + 1, hidden_dim)
    w1, b1 = init_linear(keys[3], hidden_dim, hidden_dim)
    w2, b2 = init_linear(keys[4], hidden_dim, output_dim)
    params = (w0, b0, wg, bg, wb, bb, w1, b1, w2, b2)

    x = jax.random.normal(keys[5], (B, S, F), jnp.float32)
    t = jax.random.uniform(keys[6], (B,), jnp.float32)
    y = jax.random.normal(keys[7], (B, condition_dim), jnp.float32)

    out = jax.block_until_ready(filmnet_forward(x, t, y, params))
    ref = reference_forward(x, t, y, params)
    assert out.shape == x.shape
    assert jnp.allclose(out, ref, atol=1e-5, rtol=1e-5), "mismatch vs JAX reference"

    # Batch not a multiple of the lane-packing factor (exercises padding path).
    B2 = 6
    out2 = jax.block_until_ready(
        filmnet_forward(x[:B2], t[:B2], y[:B2], params))
    ref2 = reference_forward(x[:B2], t[:B2], y[:B2], params)
    assert out2.shape == (B2, S, F)
    assert jnp.allclose(out2, ref2, atol=1e-5, rtol=1e-5), "mismatch (padded batch)"

    print("KERNEL_OK")
</pallas_src>

<mosaic_0001>
module attributes {stable_mosaic.version = 11 : i64} {
  func.func @filmnet_fused_kernel(%arg0: i32, %arg1: memref<2x128xf32, #tpu.memory_space<vmem>>, %arg2: memref<2x36xf32, #tpu.memory_space<vmem>>, %arg3: memref<128x128xf32, #tpu.memory_space<vmem>>, %arg4: memref<36x256xf32, #tpu.memory_space<vmem>>, %arg5: memref<128x128xf32, #tpu.memory_space<vmem>>, %arg6: memref<128x128xf32, #tpu.memory_space<vmem>>, %arg7: memref<1x128xf32, #tpu.memory_space<vmem>>, %arg8: memref<1x256xf32, #tpu.memory_space<vmem>>, %arg9: memref<1x128xf32, #tpu.memory_space<vmem>>, %arg10: memref<1x128xf32, #tpu.memory_space<vmem>>, %arg11: memref<2x128xf32, #tpu.memory_space<vmem>>) attributes {dimension_semantics = [#tpu.dimension_semantics<parallel>], iteration_bounds = array<i64: 1>, scalar_prefetch = 0 : i64, scratch_operands = 0 : i64, tpu.core_type = #tpu.core_type<tc>, window_params = [{transform_indices = @transform_0, window_bounds = array<i64: 2, 128>}, {transform_indices = @transform_1, window_bounds = array<i64: 2, 36>}, {pipeline_mode = #tpu.pipeline_mode<synchronous>, transform_indices = @transform_2, window_bounds = array<i64: 128, 128>}, {pipeline_mode = #tpu.pipeline_mode<synchronous>, transform_indices = @transform_3, window_bounds = array<i64: 36, 256>}, {pipeline_mode = #tpu.pipeline_mode<synchronous>, transform_indices = @transform_4, window_bounds = array<i64: 128, 128>}, {pipeline_mode = #tpu.pipeline_mode<synchronous>, transform_indices = @transform_5, window_bounds = array<i64: 128, 128>}, {pipeline_mode = #tpu.pipeline_mode<synchronous>, transform_indices = @transform_6, window_bounds = array<i64: 1, 128>}, {pipeline_mode = #tpu.pipeline_mode<synchronous>, transform_indices = @transform_7, window_bounds = array<i64: 1, 256>}, {pipeline_mode = #tpu.pipeline_mode<synchronous>, transform_indices = @transform_8, window_bounds = array<i64: 1, 128>}, {pipeline_mode = #tpu.pipeline_mode<synchronous>, transform_indices = @transform_9, window_bounds = array<i64: 1, 128>}, {transform_indices = @transform_10, window_bounds = array<i64: 2, 128>}]} {
    %c0 = arith.constant 0 : index
    %c0_0 = arith.constant 0 : index
    %0 = vector.load %arg1[%c0, %c0_0] : memref<2x128xf32, #tpu.memory_space<vmem>>, vector<2x128xf32>
    %c0_1 = arith.constant 0 : index
    %c0_2 = arith.constant 0 : index
    %1 = vector.load %arg3[%c0_1, %c0_2] : memref<128x128xf32, #tpu.memory_space<vmem>>, vector<128x128xf32>
    %cst = arith.constant dense<0.000000e+00> : vector<2x128xf32>
    %2 = tpu.matmul %0, %1, %cst {dimension_numbers = #tpu.dot_dimension_numbers<[1], [0], [0], [1], [0, 0, 1, 1], [], []>} : vector<2x128xf32>, vector<128x128xf32>, vector<2x128xf32> -> vector<2x128xf32>
    %c0_3 = arith.constant 0 : index
    %c0_4 = arith.constant 0 : index
    %3 = vector.load %arg7[%c0_3, %c0_4] : memref<1x128xf32, #tpu.memory_space<vmem>>, vector<1x128xf32>
    %4 = vector.broadcast %3 : vector<1x128xf32> to vector<2x128xf32>
    %5 = arith.addf %2, %4 : vector<2x128xf32>
    %c0_5 = arith.constant 0 : index
    %c0_6 = arith.constant 0 : index
    %6 = vector.load %arg2[%c0_5, %c0_6] : memref<2x36xf32, #tpu.memory_space<vmem>>, vector<2x36xf32>
    %c0_7 = arith.constant 0 : index
    %c0_8 = arith.constant 0 : index
    %7 = vector.load %arg4[%c0_7, %c0_8] : memref<36x256xf32, #tpu.memory_space<vmem>>, vector<36x256xf32>
    %cst_9 = arith.constant dense<0.000000e+00> : vector<2x256xf32>
    %8 = tpu.matmul %6, %7, %cst_9 {dimension_numbers = #tpu.dot_dimension_numbers<[1], [0], [0], [1], [0, 0, 1, 1], [], []>} : vector<2x36xf32>, vector<36x256xf32>, vector<2x256xf32> -> vector<2x256xf32>
    %c0_10 = arith.constant 0 : index
    %c0_11 = arith.constant 0 : index
    %9 = vector.load %arg8[%c0_10, %c0_11] : memref<1x256xf32, #tpu.memory_space<vmem>>, vector<1x256xf32>
    %10 = vector.broadcast %9 : vector<1x256xf32> to vector<2x256xf32>
    %11 = arith.addf %8, %10 : vector<2x256xf32>
    %12 = vector.extract_strided_slice %11 {offsets = [0, 0], sizes = [2, 128], strides = [1, 1]} : vector<2x256xf32> to vector<2x128xf32>
    %13 = vector.extract_strided_slice %11 {offsets = [0, 128], sizes = [2, 128], strides = [1, 1]} : vector<2x256xf32> to vector<2x128xf32>
    %14 = arith.mulf %12, %5 : vector<2x128xf32>
    %15 = arith.addf %14, %13 : vector<2x128xf32>
    %cst_12 = arith.constant 0.000000e+00 : f32
    %16 = vector.broadcast %cst_12 : f32 to vector<2x128xf32>
    %17 = arith.maximumf %15, %16 : vector<2x128xf32>
    %c0_13 = arith.constant 0 : index
    %c0_14 = arith.constant 0 : index
    %18 = vector.load %arg5[%c0_13, %c0_14] : memref<128x128xf32, #tpu.memory_space<vmem>>, vector<128x128xf32>
    %cst_15 = arith.constant dense<0.000000e+00> : vector<2x128xf32>
    %19 = tpu.matmul %17, %18, %cst_15 {dimension_numbers = #tpu.dot_dimension_numbers<[1], [0], [0], [1], [0, 0, 1, 1], [], []>} : vector<2x128xf32>, vector<128x128xf32>, vector<2x128xf32> -> vector<2x128xf32>
    %c0_16 = arith.constant 0 : index
    %c0_17 = arith.constant 0 : index
    %20 = vector.load %arg9[%c0_16, %c0_17] : memref<1x128xf32, #tpu.memory_space<vmem>>, vector<1x128xf32>
    %21 = vector.broadcast %20 : vector<1x128xf32> to vector<2x128xf32>
    %22 = arith.addf %19, %21 : vector<2x128xf32>
    %cst_18 = arith.constant 0.000000e+00 : f32
    %23 = vector.broadcast %cst_18 : f32 to vector<2x128xf32>
    %24 = arith.maximumf %22, %23 : vector<2x128xf32>
    %c0_19 = arith.constant 0 : index
    %c0_20 = arith.constant 0 : index
    %25 = vector.load %arg6[%c0_19, %c0_20] : memref<128x128xf32, #tpu.memory_space<vmem>>, vector<128x128xf32>
    %cst_21 = arith.constant dense<0.000000e+00> : vector<2x128xf32>
    %26 = tpu.matmul %24, %25, %cst_21 {dimension_numbers = #tpu.dot_dimension_numbers<[1], [0], [0], [1], [0, 0, 1, 1], [], []>} : vector<2x128xf32>, vector<128x128xf32>, vector<2x128xf32> -> vector<2x128xf32>
    %c0_22 = arith.constant 0 : index
    %c0_23 = arith.constant 0 : index
    %27 = vector.load %arg10[%c0_22, %c0_23] : memref<1x128xf32, #tpu.memory_space<vmem>>, vector<1x128xf32>
    %28 = vector.broadcast %27 : vector<1x128xf32> to vector<2x128xf32>
    %29 = arith.addf %26, %28 : vector<2x128xf32>
    %30 = tpu.iota {dimensions = array<i32: 1>} : vector<1x128xi32>
    %c4_i32 = arith.constant 4 : i32
    %c0_i32 = arith.constant 0 : i32
    %31 = arith.cmpi eq, %c4_i32, %c0_i32 : i32
    %c1_i32 = arith.constant 1 : i32
    %32 = arith.select %31, %c1_i32, %c4_i32 : i32
    %33 = vector.broadcast %32 : i32 to vector<1x128xi32>
    %34 = arith.remsi %30, %33 : vector<1x128xi32>
    %c0_i32_24 = arith.constant 0 : i32
    %35 = vector.broadcast %c0_i32_24 : i32 to vector<1x128xi32>
    %36 = arith.cmpi ne, %34, %35 : vector<1x128xi32>
    %c0_i32_25 = arith.constant 0 : i32
    %37 = vector.broadcast %c0_i32_25 : i32 to vector<1x128xi32>
    %38 = arith.cmpi slt, %34, %37 : vector<1x128xi32>
    %c0_i32_26 = arith.constant 0 : i32
    %39 = arith.cmpi slt, %32, %c0_i32_26 : i32
    %40 = vector.broadcast %39 : i1 to vector<1x128xi1>
    %41 = vector.broadcast %40 : vector<1x128xi1> to vector<1x128xi1>
    %42 = arith.xori %38, %41 : vector<1x128xi1>
    %43 = arith.andi %42, %36 : vector<1x128xi1>
    %44 = vector.broadcast %32 : i32 to vector<1x128xi32>
    %45 = arith.addi %34, %44 : vector<1x128xi32>
    %46 = arith.select %43, %45, %34 : vector<1x128xi1>, vector<1x128xi32>
    %c1_i32_27 = arith.constant 1 : i32
    %47 = tpu.dynamic_rotate %29 by %c1_i32_27 dim 1 : vector<2x128xf32>, i32 -> vector<2x128xf32>
    %c127_i32 = arith.constant 127 : i32
    %48 = tpu.dynamic_rotate %29 by %c127_i32 dim 1 : vector<2x128xf32>, i32 -> vector<2x128xf32>
    %c1_i32_28 = arith.constant 1 : i32
    %49 = vector.broadcast %c1_i32_28 : i32 to vector<1x128xi32>
    %50 = arith.cmpi sge, %46, %49 : vector<1x128xi32>
    %51 = arith.maximumf %29, %47 : vector<2x128xf32>
    %52 = vector.shape_cast %50 : vector<1x128xi1> to vector<1x128xi1>
    %53 = vector.broadcast %52 : vector<1x128xi1> to vector<2x128xi1>
    %54 = arith.select %53, %51, %29 : vector<2x128xi1>, vector<2x128xf32>
    %c3_i32 = arith.constant 3 : i32
    %55 = vector.broadcast %c3_i32 : i32 to vector<1x128xi32>
    %56 = arith.cmpi slt, %46, %55 : vector<1x128xi32>
    %57 = arith.maximumf %54, %48 : vector<2x128xf32>
    %58 = vector.shape_cast %56 : vector<1x128xi1> to vector<1x128xi1>
    %59 = vector.broadcast %58 : vector<1x128xi1> to vector<2x128xi1>
    %60 = arith.select %59, %57, %54 : vector<2x128xi1>, vector<2x128xf32>
    %c2_i32 = arith.constant 2 : i32
    %61 = tpu.dynamic_rotate %29 by %c2_i32 dim 1 : vector<2x128xf32>, i32 -> vector<2x128xf32>
    %c126_i32 = arith.constant 126 : i32
    %62 = tpu.dynamic_rotate %29 by %c126_i32 dim 1 : vector<2x128xf32>, i32 -> vector<2x128xf32>
    %c2_i32_29 = arith.constant 2 : i32
    %63 = vector.broadcast %c2_i32_29 : i32 to vector<1x128xi32>
    %64 = arith.cmpi sge, %46, %63 : vector<1x128xi32>
    %65 = arith.maximumf %60, %61 : vector<2x128xf32>
    %66 = vector.shape_cast %64 : vector<1x128xi1> to vector<1x128xi1>
    %67 = vector.broadcast %66 : vector<1x128xi1> to vector<2x128xi1>
    %68 = arith.select %67, %65, %60 : vector<2x128xi1>, vector<2x128xf32>
    %c2_i32_30 = arith.constant 2 : i32
    %69 = vector.broadcast %c2_i32_30 : i32 to vector<1x128xi32>
    %70 = arith.cmpi slt, %46, %69 : vector<1x128xi32>
    %71 = arith.maximumf %68, %62 : vector<2x128xf32>
    %72 = vector.shape_cast %70 : vector<1x128xi1> to vector<1x128xi1>
    %73 = vector.broadcast %72 : vector<1x128xi1> to vector<2x128xi1>
    %74 = arith.select %73, %71, %68 : vector<2x128xi1>, vector<2x128xf32>
    %c3_i32_31 = arith.constant 3 : i32
    %75 = tpu.dynamic_rotate %29 by %c3_i32_31 dim 1 : vector<2x128xf32>, i32 -> vector<2x128xf32>
    %c125_i32 = arith.constant 125 : i32
    %76 = tpu.dynamic_rotate %29 by %c125_i32 dim 1 : vector<2x128xf32>, i32 -> vector<2x128xf32>
    %c3_i32_32 = arith.constant 3 : i32
    %77 = vector.broadcast %c3_i32_32 : i32 to vector<1x128xi32>
    %78 = arith.cmpi sge, %46, %77 : vector<1x128xi32>
    %79 = arith.maximumf %74, %75 : vector<2x128xf32>
    %80 = vector.shape_cast %78 : vector<1x128xi1> to vector<1x128xi1>
    %81 = vector.broadcast %80 : vector<1x128xi1> to vector<2x128xi1>
    %82 = arith.select %81, %79, %74 : vector<2x128xi1>, vector<2x128xf32>
    %c1_i32_33 = arith.constant 1 : i32
    %83 = vector.broadcast %c1_i32_33 : i32 to vector<1x128xi32>
    %84 = arith.cmpi slt, %46, %83 : vector<1x128xi32>
    %85 = arith.maximumf %82, %76 : vector<2x128xf32>
    %86 = vector.shape_cast %84 : vector<1x128xi1> to vector<1x128xi1>
    %87 = vector.broadcast %86 : vector<1x128xi1> to vector<2x128xi1>
    %88 = arith.select %87, %85, %82 : vector<2x128xi1>, vector<2x128xf32>
    %89 = arith.subf %29, %88 : vector<2x128xf32>
    %90 = math.exp %89 : vector<2x128xf32>
    %c1_i32_34 = arith.constant 1 : i32
    %91 = tpu.dynamic_rotate %90 by %c1_i32_34 dim 1 : vector<2x128xf32>, i32 -> vector<2x128xf32>
    %c127_i32_35 = arith.constant 127 : i32
    %92 = tpu.dynamic_rotate %90 by %c127_i32_35 dim 1 : vector<2x128xf32>, i32 -> vector<2x128xf32>
    %c1_i32_36 = arith.constant 1 : i32
    %93 = vector.broadcast %c1_i32_36 : i32 to vector<1x128xi32>
    %94 = arith.cmpi sge, %46, %93 : vector<1x128xi32>
    %cst_37 = arith.constant 0.000000e+00 : f32
    %95 = vector.shape_cast %94 : vector<1x128xi1> to vector<1x128xi1>
    %96 = vector.broadcast %95 : vector<1x128xi1> to vector<2x128xi1>
    %97 = vector.broadcast %cst_37 : f32 to vector<2x128xf32>
    %98 = arith.select %96, %91, %97 : vector<2x128xi1>, vector<2x128xf32>
    %99 = arith.addf %90, %98 : vector<2x128xf32>
    %c3_i32_38 = arith.constant 3 : i32
    %100 = vector.broadcast %c3_i32_38 : i32 to vector<1x128xi32>
    %101 = arith.cmpi slt, %46, %100 : vector<1x128xi32>
    %cst_39 = arith.constant 0.000000e+00 : f32
    %102 = vector.shape_cast %101 : vector<1x128xi1> to vector<1x128xi1>
    %103 = vector.broadcast %102 : vector<1x128xi1> to vector<2x128xi1>
    %104 = vector.broadcast %cst_39 : f32 to vector<2x128xf32>
    %105 = arith.select %103, %92, %104 : vector<2x128xi1>, vector<2x128xf32>
    %106 = arith.addf %99, %105 : vector<2x128xf32>
    %c2_i32_40 = arith.constant 2 : i32
    %107 = tpu.dynamic_rotate %90 by %c2_i32_40 dim 1 : vector<2x128xf32>, i32 -> vector<2x128xf32>
    %c126_i32_41 = arith.constant 126 : i32
    %108 = tpu.dynamic_rotate %90 by %c126_i32_41 dim 1 : vector<2x128xf32>, i32 -> vector<2x128xf32>
    %c2_i32_42 = arith.constant 2 : i32
    %109 = vector.broadcast %c2_i32_42 : i32 to vector<1x128xi32>
    %110 = arith.cmpi sge, %46, %109 : vector<1x128xi32>
    %cst_43 = arith.constant 0.000000e+00 : f32
    %111 = vector.shape_cast %110 : vector<1x128xi1> to vector<1x128xi1>
    %112 = vector.broadcast %111 : vector<1x128xi1> to vector<2x128xi1>
    %113 = vector.broadcast %cst_43 : f32 to vector<2x128xf32>
    %114 = arith.select %112, %107, %113 : vector<2x128xi1>, vector<2x128xf32>
    %115 = arith.addf %106, %114 : vector<2x128xf32>
    %c2_i32_44 = arith.constant 2 : i32
    %116 = vector.broadcast %c2_i32_44 : i32 to vector<1x128xi32>
    %117 = arith.cmpi slt, %46, %116 : vector<1x128xi32>
    %cst_45 = arith.constant 0.000000e+00 : f32
    %118 = vector.shape_cast %117 : vector<1x128xi1> to vector<1x128xi1>
    %119 = vector.broadcast %118 : vector<1x128xi1> to vector<2x128xi1>
    %120 = vector.broadcast %cst_45 : f32 to vector<2x128xf32>
    %121 = arith.select %119, %108, %120 : vector<2x128xi1>, vector<2x128xf32>
    %122 = arith.addf %115, %121 : vector<2x128xf32>
    %c3_i32_46 = arith.constant 3 : i32
    %123 = tpu.dynamic_rotate %90 by %c3_i32_46 dim 1 : vector<2x128xf32>, i32 -> vector<2x128xf32>
    %c125_i32_47 = arith.constant 125 : i32
    %124 = tpu.dynamic_rotate %90 by %c125_i32_47 dim 1 : vector<2x128xf32>, i32 -> vector<2x128xf32>
    %c3_i32_48 = arith.constant 3 : i32
    %125 = vector.broadcast %c3_i32_48 : i32 to vector<1x128xi32>
    %126 = arith.cmpi sge, %46, %125 : vector<1x128xi32>
    %cst_49 = arith.constant 0.000000e+00 : f32
    %127 = vector.shape_cast %126 : vector<1x128xi1> to vector<1x128xi1>
    %128 = vector.broadcast %127 : vector<1x128xi1> to vector<2x128xi1>
    %129 = vector.broadcast %cst_49 : f32 to vector<2x128xf32>
    %130 = arith.select %128, %123, %129 : vector<2x128xi1>, vector<2x128xf32>
    %131 = arith.addf %122, %130 : vector<2x128xf32>
    %c1_i32_50 = arith.constant 1 : i32
    %132 = vector.broadcast %c1_i32_50 : i32 to vector<1x128xi32>
    %133 = arith.cmpi slt, %46, %132 : vector<1x128xi32>
    %cst_51 = arith.constant 0.000000e+00 : f32
    %134 = vector.shape_cast %133 : vector<1x128xi1> to vector<1x128xi1>
    %135 = vector.broadcast %134 : vector<1x128xi1> to vector<2x128xi1>
    %136 = vector.broadcast %cst_51 : f32 to vector<2x128xf32>
    %137 = arith.select %135, %124, %136 : vector<2x128xi1>, vector<2x128xf32>
    %138 = arith.addf %131, %137 : vector<2x128xf32>
    %139 = arith.divf %90, %138 : vector<2x128xf32>
    %c0_52 = arith.constant 0 : index
    %c0_53 = arith.constant 0 : index
    %140 = vector.load %arg11[%c0_52, %c0_53] : memref<2x128xf32, #tpu.memory_space<vmem>>, vector<2x128xf32>
    tpu.vector_store %arg11[%c0_52, %c0_53], %139 {strides = array<i32>} : memref<2x128xf32, #tpu.memory_space<vmem>>, vector<2x128xf32>,
    return
  }
  func.func @transform_0(%arg0: i32) -> (i32, i32) {
    %c0_i32 = arith.constant 0 : i32
    %c0_i32_0 = arith.constant 0 : i32
    return %arg0, %c0_i32 : i32, i32
  }
  func.func @transform_1(%arg0: i32) -> (i32, i32) {
    %c0_i32 = arith.constant 0 : i32
    %c0_i32_0 = arith.constant 0 : i32
    return %arg0, %c0_i32 : i32, i32
  }
  func.func @transform_2(%arg0: i32) -> (i32, i32) {
    %c0_i32 = arith.constant 0 : i32
    %c0_i32_0 = arith.constant 0 : i32
    %c0_i32_1 = arith.constant 0 : i32
    return %c0_i32, %c0_i32_0 : i32, i32
  }
  func.func @transform_3(%arg0: i32) -> (i32, i32) {
    %c0_i32 = arith.constant 0 : i32
    %c0_i32_0 = arith.constant 0 : i32
    %c0_i32_1 = arith.constant 0 : i32
    return %c0_i32, %c0_i32_0 : i32, i32
  }
  func.func @transform_4(%arg0: i32) -> (i32, i32) {
    %c0_i32 = arith.constant 0 : i32
    %c0_i32_0 = arith.constant 0 : i32
    %c0_i32_1 = arith.constant 0 : i32
    return %c0_i32, %c0_i32_0 : i32, i32
  }
  func.func @transform_5(%arg0: i32) -> (i32, i32) {
    %c0_i32 = arith.constant 0 : i32
    %c0_i32_0 = arith.constant 0 : i32
    %c0_i32_1 = arith.constant 0 : i32
    return %c0_i32, %c0_i32_0 : i32, i32
  }
  func.func @transform_6(%arg0: i32) -> (i32, i32) {
    %c0_i32 = arith.constant 0 : i32
    %c0_i32_0 = arith.constant 0 : i32
    %c0_i32_1 = arith.constant 0 : i32
    return %c0_i32, %c0_i32_0 : i32, i32
  }
  func.func @transform_7(%arg0: i32) -> (i32, i32) {
    %c0_i32 = arith.constant 0 : i32
    %c0_i32_0 = arith.constant 0 : i32
    %c0_i32_1 = arith.constant 0 : i32
    return %c0_i32, %c0_i32_0 : i32, i32
  }
  func.func @transform_8(%arg0: i32) -> (i32, i32) {
    %c0_i32 = arith.constant 0 : i32
    %c0_i32_0 = arith.constant 0 : i32
    %c0_i32_1 = arith.constant 0 : i32
    return %c0_i32, %c0_i32_0 : i32, i32
  }
  func.func @transform_9(%arg0: i32) -> (i32, i32) {
    %c0_i32 = arith.constant 0 : i32
    %c0_i32_0 = arith.constant 0 : i32
    %c0_i32_1 = arith.constant 0 : i32
    return %c0_i32, %c0_i32_0 : i32, i32
  }
  func.func @transform_10(%arg0: i32) -> (i32, i32) {
    %c0_i32 = arith.constant 0 : i32
    %c0_i32_0 = arith.constant 0 : i32
    return %arg0, %c0_i32 : i32, i32
  }
}

</mosaic_0001>

<llo_original>
// kernel: tpu_custom_call.1
$region0: #{tpu_custom_call.1}
  #allocation0 [shape = 'u32[]', space=smem, size = 0x4, offset = 0x4, fixed_abs, tag = 'smem constant byte address 0x4 - core index']
  #allocation1 [shape = 'u32[144,128]{1,0:T(1,128)}', space=vmem, size = 0x12000, scoped, tag = 'internal scratch']
  %s0 = inlined_call_operand.hbm [shape: f32[2,128], index: 0, kind: input, shape index: {}]
  %s1 = inlined_call_operand.hbm [shape: f32[2,36], index: 1, kind: input, shape index: {}]
  %s2 = inlined_call_operand.hbm [shape: f32[128,128], index: 2, kind: input, shape index: {}]
  %s3 = inlined_call_operand.hbm [shape: f32[36,256], index: 3, kind: input, shape index: {}]
  %s4 = inlined_call_operand.hbm [shape: f32[128,128], index: 4, kind: input, shape index: {}]
  %s5 = inlined_call_operand.hbm [shape: f32[128,128], index: 5, kind: input, shape index: {}]
  %s6 = inlined_call_operand.vmem [shape: f32[1,128], index: 6, kind: input, shape index: {}]
  %s7 = inlined_call_operand.vmem [shape: f32[1,256], index: 7, kind: input, shape index: {}]
  %s8 = inlined_call_operand.vmem [shape: f32[1,128], index: 8, kind: input, shape index: {}]
  %s9 = inlined_call_operand.vmem [shape: f32[1,128], index: 9, kind: input, shape index: {}]
  %s10 = inlined_call_operand.hbm [shape: f32[2,128], index: 10, kind: output, shape index: {}]
  %s11 = sld [smem:[#allocation0]]
  $region74: #{tpu_custom_call.1} parent=0
    _
  %s13 = ssub.s32 1, %s11
  %s14 = scalar_select 0, %s13, %s11
  $region1: #{tpu_custom_call.1} parent=0
    #allocation2 [shape = 'u8[1024]{0}', space=vmem, size = 0x400, scoped, tag = 'input window, operand 0, single buffered']
    #allocation3 [shape = 's32[1]{0}', space=sflag, size = 0x4, scoped, tag = 'scoped memory for tpu_custom_call.1']
    #allocation4 [shape = 's32[1]{0}', space=sflag, size = 0x4, scoped, tag = 'scoped memory for tpu_custom_call.1']
    #allocation5 [shape = 'u8[1024]{0}', space=vmem, size = 0x400, scoped, tag = 'input window, operand 1, single buffered']
    #allocation6 [shape = 's32[1]{0}', space=sflag, size = 0x4, scoped, tag = 'scoped memory for tpu_custom_call.1']
    #allocation7 [shape = 'u8[65536]{0}', space=vmem, size = 0x10000, scoped, tag = 'input window, operand 2, single buffered']
    #allocation8 [shape = 'u8[40960]{0}', space=vmem, size = 0xa000, scoped, tag = 'input window, operand 3, single buffered']
    #allocation9 [shape = 's32[1]{0}', space=sflag, size = 0x4, scoped, tag = 'scoped memory for tpu_custom_call.1']
    #allocation10 [shape = 'u8[65536]{0}', space=vmem, size = 0x10000, scoped, tag = 'input window, operand 4, single buffered']
    #allocation11 [shape = 'u8[65536]{0}', space=vmem, size = 0x10000, scoped, tag = 'input window, operand 5, single buffered']
    #allocation12 [shape = 's32[1]{0}', space=sflag, size = 0x4, scoped, tag = 'scoped memory for tpu_custom_call.1']
    #allocation13 [shape = 'u8[1024]{0}', space=vmem, size = 0x400, scoped, tag = 'output window, operand 0, single buffered']
    %15 = vsyncpa [#allocation3], 0
    %16 = vsyncpa [#allocation6], 0
    %17 = vsyncpa [#allocation9], 0
    %18 = vsyncpa [#allocation12], 0
    %19 = vsyncpa [#allocation4], 0
    // Predicated region
    $region2: #{tpu_custom_call.1} parent=1 // pred_check
      _
    $region3: #{tpu_custom_call.1} parent=1 // pred_check_branch
      %21 = sbr.rel (0) target = $region5
    $region4: #{tpu_custom_call.1} parent=1 // pred_region
      %s23 = ssub.s32 32, 32
      %24 = vsyncadd [#allocation3], %s23
      %s26 = sshll.u32 [#allocation2], 4
      %s27 = int_to_ptr.vmem [resolvable:$true] %s26
      %29 = dma.hbm_to_vmem [thread:$0]  %s0, 32, %s27, [#allocation3]
    $region5: #{tpu_custom_call.1} parent=1 // pred_fallthru
      _
    // Predicated region
    $region6: #{tpu_custom_call.1} parent=1 // pred_check
      _
    $region7: #{tpu_custom_call.1} parent=1 // pred_check_branch
      %31 = sbr.rel (0) target = $region9
    $region8: #{tpu_custom_call.1} parent=1 // pred_region
      %s33 = ssub.s32 32, 32
      %34 = vsyncadd [#allocation6], %s33
      %s36 = sshll.u32 [#allocation5], 4
      %s37 = int_to_ptr.vmem [resolvable:$true] %s36
      %39 = dma.hbm_to_vmem [thread:$0]  %s1, 32, %s37, [#allocation6]
    $region9: #{tpu_custom_call.1} parent=1 // pred_fallthru
      _
    // Predicated region
    $region10: #{tpu_custom_call.1} parent=1 // pred_check
      _
    $region11: #{tpu_custom_call.1} parent=1 // pred_check_branch
      %41 = sbr.rel (0) target = $region13
    $region12: #{tpu_custom_call.1} parent=1 // pred_region
      %s43 = ssub.s32 2048, 2048
      %44 = vsyncadd [#allocation6], %s43
      %s45 = sshll.u32 [#allocation7], 4
      %s46 = int_to_ptr.vmem [resolvable:$true] %s45
      %51 = dma.hbm_to_vmem [thread:$0]  %s2, 2048, %s46, [#allocation6], 128, 128, 8
    $region13: #{tpu_custom_call.1} parent=1 // pred_fallthru
      _
    // Predicated region
    $region14: #{tpu_custom_call.1} parent=1 // pred_check
      _
    $region15: #{tpu_custom_call.1} parent=1 // pred_check_branch
      %53 = sbr.rel (0) target = $region17
    $region16: #{tpu_custom_call.1} parent=1 // pred_region
      %s55 = ssub.s32 1280, 1280
      %56 = vsyncadd [#allocation9], %s55
      %s57 = sshll.u32 [#allocation8], 4
      %s58 = int_to_ptr.vmem [resolvable:$true] %s57
      %63 = dma.hbm_to_vmem [thread:$0]  %s3, 1280, %s58, [#allocation9], 256, 256, 16
    $region17: #{tpu_custom_call.1} parent=1 // pred_fallthru
      _
    // Predicated region
    $region18: #{tpu_custom_call.1} parent=1 // pred_check
      _
    $region19: #{tpu_custom_call.1} parent=1 // pred_check_branch
      %65 = sbr.rel (0) target = $region21
    $region20: #{tpu_custom_call.1} parent=1 // pred_region
      %s67 = ssub.s32 2048, 2048
      %68 = vsyncadd [#allocation9], %s67
      %s69 = sshll.u32 [#allocation10], 4
      %s70 = int_to_ptr.vmem [resolvable:$true] %s69
      %75 = dma.hbm_to_vmem [thread:$0]  %s4, 2048, %s70, [#allocation9], 128, 128, 8
    $region21: #{tpu_custom_call.1} parent=1 // pred_fallthru
      _
    // Predicated region
    $region22: #{tpu_custom_call.1} parent=1 // pred_check
      _
    $region23: #{tpu_custom_call.1} parent=1 // pred_check_branch
      %77 = sbr.rel (0) target = $region25
    $region24: #{tpu_custom_call.1} parent=1 // pred_region
      %s79 = ssub.s32 2048, 2048
      %80 = vsyncadd [#allocation12], %s79
      %s81 = sshll.u32 [#allocation11], 4
      %s82 = int_to_ptr.vmem [resolvable:$true] %s81
      %87 = dma.hbm_to_vmem [thread:$0]  %s5, 2048, %s82, [#allocation12], 128, 128, 8
    $region25: #{tpu_custom_call.1} parent=1 // pred_fallthru
      _
    // Predicated region
    $region26: #{tpu_custom_call.1} parent=1 // pred_check
      _
    $region27: #{tpu_custom_call.1} parent=1 // pred_check_branch
      %89 = sbr.rel (0) target = $region29
    $region28: #{tpu_custom_call.1} parent=1 // pred_region
      _
    $region29: #{tpu_custom_call.1} parent=1 // pred_fallthru
      _
    // Predicated region
    $region30: #{tpu_custom_call.1} parent=1 // pred_check
      _
    $region31: #{tpu_custom_call.1} parent=1 // pred_check_branch
      %91 = sbr.rel (0) target = $region33
    $region32: #{tpu_custom_call.1} parent=1 // pred_region
      _
    $region33: #{tpu_custom_call.1} parent=1 // pred_fallthru
      _
    // Predicated region
    $region34: #{tpu_custom_call.1} parent=1 // pred_check
      _
    $region35: #{tpu_custom_call.1} parent=1 // pred_check_branch
      %93 = sbr.rel (0) target = $region37
    $region36: #{tpu_custom_call.1} parent=1 // pred_region
      _
    $region37: #{tpu_custom_call.1} parent=1 // pred_fallthru
      _
    // Predicated region
    $region38: #{tpu_custom_call.1} parent=1 // pred_check
      _
    $region39: #{tpu_custom_call.1} parent=1 // pred_check_branch
      %95 = sbr.rel (0) target = $region41
    $region40: #{tpu_custom_call.1} parent=1 // pred_region
      _
    $region41: #{tpu_custom_call.1} parent=1 // pred_fallthru
      _
    // Predicated region
    $region42: #{tpu_custom_call.1} parent=1 // pred_check
      _
    $region43: #{tpu_custom_call.1} parent=1 // pred_check_branch
      %97 = sbr.rel (0) target = $region45
    $region44: #{tpu_custom_call.1} parent=1 // pred_region
      %98 = dma.done [#allocation3], 32
    $region45: #{tpu_custom_call.1} parent=1 // pred_fallthru
      _
    // Predicated region
    $region46: #{tpu_custom_call.1} parent=1 // pred_check
      _
    $region47: #{tpu_custom_call.1} parent=1 // pred_check_branch
      %100 = sbr.rel (0) target = $region49
    $region48: #{tpu_custom_call.1} parent=1 // pred_region
      %101 = dma.done [#allocation6], 32
    $region49: #{tpu_custom_call.1} parent=1 // pred_fallthru
      _
    // Predicated region
    $region50: #{tpu_custom_call.1} parent=1 // pred_check
      _
    $region51: #{tpu_custom_call.1} parent=1 // pred_check_branch
      %103 = sbr.rel (0) target = $region53
    $region52: #{tpu_custom_call.1} parent=1 // pred_region
      %104 = dma.done [#allocation6], 2048
    $region53: #{tpu_custom_call.1} parent=1 // pred_fallthru
      _
    // Predicated region
    $region54: #{tpu_custom_call.1} parent=1 // pred_check
      _
    $region55: #{tpu_custom_call.1} parent=1 // pred_check_branch
      %106 = sbr.rel (0) target = $region57
    $region56: #{tpu_custom_call.1} parent=1 // pred_region
      %107 = dma.done [#allocation9], 1280
    $region57: #{tpu_custom_call.1} parent=1 // pred_fallthru
      _
    // Predicated region
    $region58: #{tpu_custom_call.1} parent=1 // pred_check
      _
    $region59: #{tpu_custom_call.1} parent=1 // pred_check_branch
      %109 = sbr.rel (0) target = $region61
    $region60: #{tpu_custom_call.1} parent=1 // pred_region
      %110 = dma.done [#allocation9], 2048
    $region61: #{tpu_custom_call.1} parent=1 // pred_fallthru
      _
    // Predicated region
    $region62: #{tpu_custom_call.1} parent=1 // pred_check
      _
    $region63: #{tpu_custom_call.1} parent=1 // pred_check_branch
      %112 = sbr.rel (0) target = $region65
    $region64: #{tpu_custom_call.1} parent=1 // pred_region
      %113 = dma.done [#allocation12], 2048
    $region65: #{tpu_custom_call.1} parent=1 // pred_fallthru
      _
    %v114 = vld [vmem:[#allocation2] sm:$0x3]
    %v115 = vld [vmem:[#allocation7] sm:$0xff]
    %v116 = vld [vmem:[#allocation7 + $0x8] sm:$0xff]
    %v117 = vld [vmem:[#allocation7 + $0x10] sm:$0xff]
    %v118 = vld [vmem:[#allocation7 + $0x18] sm:$0xff]
    %v119 = vld [vmem:[#allocation7 + $0x20] sm:$0xff]
    %v120 = vld [vmem:[#allocation7 + $0x28] sm:$0xff]
    %v121 = vld [vmem:[#allocation7 + $0x30] sm:$0xff]
    %v122 = vld [vmem:[#allocation7 + $0x38] sm:$0xff]
    %v123 = vld [vmem:[#allocation7 + $0x40] sm:$0xff]
    %v124 = vld [vmem:[#allocation7 + $0x48] sm:$0xff]
    %v125 = vld [vmem:[#allocation7 + $0x50] sm:$0xff]
    %v126 = vld [vmem:[#allocation7 + $0x58] sm:$0xff]
    %v127 = vld [vmem:[#allocation7 + $0x60] sm:$0xff]
    %v128 = vld [vmem:[#allocation7 + $0x68] sm:$0xff]
    %v129 = vld [vmem:[#allocation7 + $0x70] sm:$0xff]
    %v130 = vld [vmem:[#allocation7 + $0x78] sm:$0xff]
    %v131 = vld [vmem:[%s6] sm:$0x1]
    %v133 = vlaneseq
    %v134 = vshrl.u32 %v133, 7
    %v135 = vsub.s32 0, %v134
    %v136 = vrot.slane %v131, %v135
    %138 = vmatprep.subr.mxu0 0.0
    %139 = vmatpush1.msra.mxu0 %v130
    %140 = vmatprep.subr.mxu0 0.0
    %141 = vmatpush1.msra.mxu0 %v129
    %142 = vmatprep.subr.mxu0 0.0
    %143 = vmatpush1.msra.mxu0 %v128
    %144 = vmatprep.subr.mxu0 0.0
    %145 = vmatpush1.msra.mxu0 %v127
    %146 = vmatprep.subr.mxu0 0.0
    %147 = vmatpush1.msra.mxu0 %v126
    %148 = vmatprep.subr.mxu0 0.0
    %149 = vmatpush1.msra.mxu0 %v125
    %150 = vmatprep.subr.mxu0 0.0
    %151 = vmatpush1.msra.mxu0 %v124
    %152 = vmatprep.subr.mxu0 0.0
    %153 = vmatpush1.msra.mxu0 %v123
    %154 = vmatprep.subr.mxu0 0.0
    %155 = vmatpush1.msra.mxu0 %v122
    %156 = vmatprep.subr.mxu0 0.0
    %157 = vmatpush1.msra.mxu0 %v121
    %158 = vmatprep.subr.mxu0 0.0
    %159 = vmatpush1.msra.mxu0 %v120
    %160 = vmatprep.subr.mxu0 0.0
    %161 = vmatpush1.msra.mxu0 %v119
    %162 = vmatprep.subr.mxu0 0.0
    %163 = vmatpush1.msra.mxu0 %v118
    %164 = vmatprep.subr.mxu0 0.0
    %165 = vmatpush1.msra.mxu0 %v117
    %166 = vmatprep.subr.mxu0 0.0
    %167 = vmatpush1.msra.mxu0 %v116
    %168 = vmatprep.subr.mxu0 0.0
    %169 = vmatpush1.msra.mxu0 %v115
    %170 = vmatprep.subr.mxu0 0.0
    %171 = vmatpush2.msra.mxu0 0.0
    %172 = vmatprep.subr.mxu0 0.0
    %173 = vmatpush2.msra.mxu0 0.0
    %174 = vmatprep.subr.mxu0 0.0
    %175 = vmatpush2.msra.mxu0 0.0
    %176 = vmatprep.subr.mxu0 0.0
    %177 = vmatpush2.msra.mxu0 0.0
    %178 = vmatprep.subr.mxu0 0.0
    %179 = vmatpush2.msra.mxu0 0.0
    %180 = vmatprep.subr.mxu0 0.0
    %181 = vmatpush2.msra.mxu0 0.0
    %182 = vmatprep.subr.mxu0 0.0
    %183 = vmatpush2.msra.mxu0 0.0
    %184 = vmatprep.subr.mxu0 0.0
    %185 = vmatpush2.msra.mxu0 0.0
    %186 = vmatprep.subr.mxu0 0.0
    %187 = vmatpush2.msra.mxu0 0.0
    %188 = vmatprep.subr.mxu0 0.0
    %189 = vmatpush2.msra.mxu0 0.0
    %190 = vmatprep.subr.mxu0 0.0
    %191 = vmatpush2.msra.mxu0 0.0
    %192 = vmatprep.subr.mxu0 0.0
    %193 = vmatpush2.msra.mxu0 0.0
    %194 = vmatprep.subr.mxu0 0.0
    %195 = vmatpush2.msra.mxu0 0.0
    %196 = vmatprep.subr.mxu0 0.0
    %197 = vmatpush2.msra.mxu0 0.0
    %198 = vmatprep.subr.mxu0 0.0
    %199 = vmatpush2.msra.mxu0 0.0
    %200 = vmatprep.subr.mxu0 0.0
    %201 = vmatpush2.msra.mxu0 0.0
    %202 = vmatprep.mubr.f32.mxu0 0.0
    %203 = vmatmul.mubr.f32.gmra.mxu0 %v114
    %v204 = vpop.f32.mrf.mxu0
    %v205 = vadd.f32 %v136, %v204
    %v206 = vpop.f32.mrf.mxu0
    %207 = vdwg.mxu0
    %v208 = vld [vmem:[#allocation5] sm:$0x3]
    %v209 = vld [vmem:[#allocation8] sm:$0xff]
    %v210 = vld [vmem:[#allocation8 + $0x8] sm:$0xff]
    %v211 = vld [vmem:[#allocation8 + $0x10] sm:$0xff]
    %v212 = vld [vmem:[#allocation8 + $0x18] sm:$0xff]
    %v213 = vld [vmem:[#allocation8 + $0x20] sm:$0xff]
    %v214 = vld [vmem:[#allocation8 + $0x28] sm:$0xff]
    %v215 = vld [vmem:[#allocation8 + $0x30] sm:$0xff]
    %v216 = vld [vmem:[#allocation8 + $0x38] sm:$0xff]
    %v217 = vld [vmem:[#allocation8 + $0x40] sm:$0xf]
    %v218 = vld [vmem:[#allocation8 + $0x48] sm:$0xf]
    %v219 = vld [vmem:[%s7] sm:$0x3]
    %v221 = vlaneseq
    %v222 = vshrl.u32 %v221, 7
    %v223 = vsub.s32 0, %v222
    %v224 = vrot.slane %v219, %v223
    %v225 = vlaneseq
    %v226 = vshrl.u32 %v225, 7
    %v227 = vsub.s32 1, %v226
    %v228 = vrot.slane %v219, %v227
    %vm231 = vcmask 293888
    %v233 = vsel %vm231, %v208, 0
    %vm235 = vcmask 1043456
    %v237 = vsel %vm235, %v217, 0
    %v240 = vsel %vm235, %v218, 0
    %242 = vmatprep.subr.mxu0 0.0
    %243 = vmatpush1.msra.mxu0 0.0
    %244 = vmatprep.subr.mxu0 0.0
    %245 = vmatpush1.msra.mxu0 0.0
    %246 = vmatprep.subr.mxu0 0.0
    %247 = vmatpush1.msra.mxu0 0.0
    %248 = vmatprep.subr.mxu0 0.0
    %249 = vmatpush1.msra.mxu0 0.0
    %250 = vmatprep.subr.mxu0 0.0
    %251 = vmatpush1.msra.mxu0 0.0
    %252 = vmatprep.subr.mxu0 0.0
    %253 = vmatpush1.msra.mxu0 0.0
    %254 = vmatprep.subr.mxu0 0.0
    %255 = vmatpush1.msra.mxu0 0.0
    %256 = vmatprep.subr.mxu0 0.0
    %257 = vmatpush1.msra.mxu0 0.0
    %258 = vmatprep.subr.mxu0 0.0
    %259 = vmatpush1.msra.mxu0 0.0
    %260 = vmatprep.subr.mxu0 0.0
    %261 = vmatpush1.msra.mxu0 0.0
    %262 = vmatprep.subr.mxu0 0.0
    %263 = vmatpush1.msra.mxu0 0.0
    %264 = vmatprep.subr.mxu0 %v240
    %265 = vmatpush1.msra.mxu0 %v237
    %266 = vmatprep.subr.mxu0 %v216
    %267 = vmatpush1.msra.mxu0 %v215
    %268 = vmatprep.subr.mxu0 %v214
    %269 = vmatpush1.msra.mxu0 %v213
    %270 = vmatprep.subr.mxu0 %v212
    %271 = vmatpush1.msra.mxu0 %v211
    %272 = vmatprep.subr.mxu0 %v210
    %273 = vmatpush1.msra.mxu0 %v209
    %274 = vmatprep.subr.mxu0 0.0
    %275 = vmatpush2.msra.mxu0 0.0
    %276 = vmatprep.subr.mxu0 0.0
    %277 = vmatpush2.msra.mxu0 0.0
    %278 = vmatprep.subr.mxu0 0.0
    %279 = vmatpush2.msra.mxu0 0.0
    %280 = vmatprep.subr.mxu0 0.0
    %281 = vmatpush2.msra.mxu0 0.0
    %282 = vmatprep.subr.mxu0 0.0
    %283 = vmatpush2.msra.mxu0 0.0
    %284 = vmatprep.subr.mxu0 0.0
    %285 = vmatpush2.msra.mxu0 0.0
    %286 = vmatprep.subr.mxu0 0.0
    %287 = vmatpush2.msra.mxu0 0.0
    %288 = vmatprep.subr.mxu0 0.0
    %289 = vmatpush2.msra.mxu0 0.0
    %290 = vmatprep.subr.mxu0 0.0
    %291 = vmatpush2.msra.mxu0 0.0
    %292 = vmatprep.subr.mxu0 0.0
    %293 = vmatpush2.msra.mxu0 0.0
    %294 = vmatprep.subr.mxu0 0.0
    %295 = vmatpush2.msra.mxu0 0.0
    %296 = vmatprep.subr.mxu0 0.0
    %297 = vmatpush2.msra.mxu0 0.0
    %298 = vmatprep.subr.mxu0 0.0
    %299 = vmatpush2.msra.mxu0 0.0
    %300 = vmatprep.subr.mxu0 0.0
    %301 = vmatpush2.msra.mxu0 0.0
    %302 = vmatprep.subr.mxu0 0.0
    %303 = vmatpush2.msra.mxu0 0.0
    %304 = vmatprep.subr.mxu0 0.0
    %305 = vmatpush2.msra.mxu0 0.0
    %306 = vmatprep.mubr.f32.mxu0 0.0
    %307 = vmatmul.mubr.f32.gmra.mxu0 %v233
    %v308 = vpop.f32.mrf.mxu0
    %v309 = vadd.f32 %v224, %v308
    %v310 = vpop.f32.mrf.mxu0
    %v311 = vadd.f32 %v228, %v310
    %312 = vdwg.mxu0
    %v313 = vmul.f32 %v309, %v205
    %v314 = vadd.f32 %v313, %v311
    %v315 = vmax.f32 %v314, 0.0
    %v316 = vld [vmem:[#allocation10] sm:$0xff]
    %v317 = vld [vmem:[#allocation10 + $0x8] sm:$0xff]
    %v318 = vld [vmem:[#allocation10 + $0x10] sm:$0xff]
    %v319 = vld [vmem:[#allocation10 + $0x18] sm:$0xff]
    %v320 = vld [vmem:[#allocation10 + $0x20] sm:$0xff]
    %v321 = vld [vmem:[#allocation10 + $0x28] sm:$0xff]
    %v322 = vld [vmem:[#allocation10 + $0x30] sm:$0xff]
    %v323 = vld [vmem:[#allocation10 + $0x38] sm:$0xff]
    %v324 = vld [vmem:[#allocation10 + $0x40] sm:$0xff]
    %v325 = vld [vmem:[#allocation10 + $0x48] sm:$0xff]
    %v326 = vld [vmem:[#allocation10 + $0x50] sm:$0xff]
    %v327 = vld [vmem:[#allocation10 + $0x58] sm:$0xff]
    %v328 = vld [vmem:[#allocation10 + $0x60] sm:$0xff]
    %v329 = vld [vmem:[#allocation10 + $0x68] sm:$0xff]
    %v330 = vld [vmem:[#allocation10 + $0x70] sm:$0xff]
    %v331 = vld [vmem:[#allocation10 + $0x78] sm:$0xff]
    %v332 = vld [vmem:[%s8] sm:$0x1]
    %v334 = vlaneseq
    %v335 = vshrl.u32 %v334, 7
    %v336 = vsub.s32 0, %v335
    %v337 = vrot.slane %v332, %v336
    %339 = vmatprep.subr.mxu0 0.0
    %340 = vmatpush1.msra.mxu0 %v331
    %341 = vmatprep.subr.mxu0 0.0
    %342 = vmatpush1.msra.mxu0 %v330
    %343 = vmatprep.subr.mxu0 0.0
    %344 = vmatpush1.msra.mxu0 %v329
    %345 = vmatprep.subr.mxu0 0.0
    %346 = vmatpush1.msra.mxu0 %v328
    %347 = vmatprep.subr.mxu0 0.0
    %348 = vmatpush1.msra.mxu0 %v327
    %349 = vmatprep.subr.mxu0 0.0
    %350 = vmatpush1.msra.mxu0 %v326
    %351 = vmatprep.subr.mxu0 0.0
    %352 = vmatpush1.msra.mxu0 %v325
    %353 = vmatprep.subr.mxu0 0.0
    %354 = vmatpush1.msra.mxu0 %v324
    %355 = vmatprep.subr.mxu0 0.0
    %356 = vmatpush1.msra.mxu0 %v323
    %357 = vmatprep.subr.mxu0 0.0
    %358 = vmatpush1.msra.mxu0 %v322
    %359 = vmatprep.subr.mxu0 0.0
    %360 = vmatpush1.msra.mxu0 %v321
    %361 = vmatprep.subr.mxu0 0.0
    %362 = vmatpush1.msra.mxu0 %v320
    %363 = vmatprep.subr.mxu0 0.0
    %364 = vmatpush1.msra.mxu0 %v319
    %365 = vmatprep.subr.mxu0 0.0
    %366 = vmatpush1.msra.mxu0 %v318
    %367 = vmatprep.subr.mxu0 0.0
    %368 = vmatpush1.msra.mxu0 %v317
    %369 = vmatprep.subr.mxu0 0.0
    %370 = vmatpush1.msra.mxu0 %v316
    %371 = vmatprep.subr.mxu0 0.0
    %372 = vmatpush2.msra.mxu0 0.0
    %373 = vmatprep.subr.mxu0 0.0
    %374 = vmatpush2.msra.mxu0 0.0
    %375 = vmatprep.subr.mxu0 0.0
    %376 = vmatpush2.msra.mxu0 0.0
    %377 = vmatprep.subr.mxu0 0.0
    %378 = vmatpush2.msra.mxu0 0.0
    %379 = vmatprep.subr.mxu0 0.0
    %380 = vmatpush2.msra.mxu0 0.0
    %381 = vmatprep.subr.mxu0 0.0
    %382 = vmatpush2.msra.mxu0 0.0
    %383 = vmatprep.subr.mxu0 0.0
    %384 = vmatpush2.msra.mxu0 0.0
    %385 = vmatprep.subr.mxu0 0.0
    %386 = vmatpush2.msra.mxu0 0.0
    %387 = vmatprep.subr.mxu0 0.0
    %388 = vmatpush2.msra.mxu0 0.0
    %389 = vmatprep.subr.mxu0 0.0
    %390 = vmatpush2.msra.mxu0 0.0
    %391 = vmatprep.subr.mxu0 0.0
    %392 = vmatpush2.msra.mxu0 0.0
    %393 = vmatprep.subr.mxu0 0.0
    %394 = vmatpush2.msra.mxu0 0.0
    %395 = vmatprep.subr.mxu0 0.0
    %396 = vmatpush2.msra.mxu0 0.0
    %397 = vmatprep.subr.mxu0 0.0
    %398 = vmatpush2.msra.mxu0 0.0
    %399 = vmatprep.subr.mxu0 0.0
    %400 = vmatpush2.msra.mxu0 0.0
    %401 = vmatprep.subr.mxu0 0.0
    %402 = vmatpush2.msra.mxu0 0.0
    %403 = vmatprep.mubr.f32.mxu0 0.0
    %404 = vmatmul.mubr.f32.gmra.mxu0 %v315
    %v405 = vpop.f32.mrf.mxu0
    %v406 = vadd.f32 %v337, %v405
    %v407 = vpop.f32.mrf.mxu0
    %408 = vdwg.mxu0
    %v409 = vmax.f32 %v406, 0.0
    %v410 = vld [vmem:[#allocation11] sm:$0xff]
    %v411 = vld [vmem:[#allocation11 + $0x8] sm:$0xff]
    %v412 = vld [vmem:[#allocation11 + $0x10] sm:$0xff]
    %v413 = vld [vmem:[#allocation11 + $0x18] sm:$0xff]
    %v414 = vld [vmem:[#allocation11 + $0x20] sm:$0xff]
    %v415 = vld [vmem:[#allocation11 + $0x28] sm:$0xff]
    %v416 = vld [vmem:[#allocation11 + $0x30] sm:$0xff]
    %v417 = vld [vmem:[#allocation11 + $0x38] sm:$0xff]
    %v418 = vld [vmem:[#allocation11 + $0x40] sm:$0xff]
    %v419 = vld [vmem:[#allocation11 + $0x48] sm:$0xff]
    %v420 = vld [vmem:[#allocation11 + $0x50] sm:$0xff]
    %v421 = vld [vmem:[#allocation11 + $0x58] sm:$0xff]
    %v422 = vld [vmem:[#allocation11 + $0x60] sm:$0xff]
    %v423 = vld [vmem:[#allocation11 + $0x68] sm:$0xff]
    %v424 = vld [vmem:[#allocation11 + $0x70] sm:$0xff]
    %v425 = vld [vmem:[#allocation11 + $0x78] sm:$0xff]
    %v426 = vld [vmem:[%s9] sm:$0x1]
    %v428 = vlaneseq
    %v429 = vshrl.u32 %v428, 7
    %v430 = vsub.s32 0, %v429
    %v431 = vrot.slane %v426, %v430
    %433 = vmatprep.subr.mxu0 0.0
    %434 = vmatpush1.msra.mxu0 %v425
    %435 = vmatprep.subr.mxu0 0.0
    %436 = vmatpush1.msra.mxu0 %v424
    %437 = vmatprep.subr.mxu0 0.0
    %438 = vmatpush1.msra.mxu0 %v423
    %439 = vmatprep.subr.mxu0 0.0
    %440 = vmatpush1.msra.mxu0 %v422
    %441 = vmatprep.subr.mxu0 0.0
    %442 = vmatpush1.msra.mxu0 %v421
    %443 = vmatprep.subr.mxu0 0.0
    %444 = vmatpush1.msra.mxu0 %v420
    %445 = vmatprep.subr.mxu0 0.0
    %446 = vmatpush1.msra.mxu0 %v419
    %447 = vmatprep.subr.mxu0 0.0
    %448 = vmatpush1.msra.mxu0 %v418
    %449 = vmatprep.subr.mxu0 0.0
    %450 = vmatpush1.msra.mxu0 %v417
    %451 = vmatprep.subr.mxu0 0.0
    %452 = vmatpush1.msra.mxu0 %v416
    %453 = vmatprep.subr.mxu0 0.0
    %454 = vmatpush1.msra.mxu0 %v415
    %455 = vmatprep.subr.mxu0 0.0
    %456 = vmatpush1.msra.mxu0 %v414
    %457 = vmatprep.subr.mxu0 0.0
    %458 = vmatpush1.msra.mxu0 %v413
    %459 = vmatprep.subr.mxu0 0.0
    %460 = vmatpush1.msra.mxu0 %v412
    %461 = vmatprep.subr.mxu0 0.0
    %462 = vmatpush1.msra.mxu0 %v411
    %463 = vmatprep.subr.mxu0 0.0
    %464 = vmatpush1.msra.mxu0 %v410
    %465 = vmatprep.subr.mxu0 0.0
    %466 = vmatpush2.msra.mxu0 0.0
    %467 = vmatprep.subr.mxu0 0.0
    %468 = vmatpush2.msra.mxu0 0.0
    %469 = vmatprep.subr.mxu0 0.0
    %470 = vmatpush2.msra.mxu0 0.0
    %471 = vmatprep.subr.mxu0 0.0
    %472 = vmatpush2.msra.mxu0 0.0
    %473 = vmatprep.subr.mxu0 0.0
    %474 = vmatpush2.msra.mxu0 0.0
    %475 = vmatprep.subr.mxu0 0.0
    %476 = vmatpush2.msra.mxu0 0.0
    %477 = vmatprep.subr.mxu0 0.0
    %478 = vmatpush2.msra.mxu0 0.0
    %479 = vmatprep.subr.mxu0 0.0
    %480 = vmatpush2.msra.mxu0 0.0
    %481 = vmatprep.subr.mxu0 0.0
    %482 = vmatpush2.msra.mxu0 0.0
    %483 = vmatprep.subr.mxu0 0.0
    %484 = vmatpush2.msra.mxu0 0.0
    %485 = vmatprep.subr.mxu0 0.0
    %486 = vmatpush2.msra.mxu0 0.0
    %487 = vmatprep.subr.mxu0 0.0
    %488 = vmatpush2.msra.mxu0 0.0
    %489 = vmatprep.subr.mxu0 0.0
    %490 = vmatpush2.msra.mxu0 0.0
    %491 = vmatprep.subr.mxu0 0.0
    %492 = vmatpush2.msra.mxu0 0.0
    %493 = vmatprep.subr.mxu0 0.0
    %494 = vmatpush2.msra.mxu0 0.0
    %495 = vmatprep.subr.mxu0 0.0
    %496 = vmatpush2.msra.mxu0 0.0
    %497 = vmatprep.mubr.f32.mxu0 0.0
    %498 = vmatmul.mubr.f32.gmra.mxu0 %v409
    %v499 = vpop.f32.mrf.mxu0
    %v500 = vadd.f32 %v431, %v499
    %v501 = vpop.f32.mrf.mxu0
    %502 = vdwg.mxu0
    %v503 = vlaneseq
    %v504 = vand.u32 %v503, 127
    %vm505 = vcmp.lt.s32.totalorder %v504, 0
    %v506 = vsub.s32 0, %v504
    %v507 = vsel %vm505, %v506, %v504
    %v508 = vshrl.u32 %v507, 2
    %v509 = vand.u32 %v507, 3
    %v510 = vsub.s32 0, %v509
    %v511 = vsel %vm505, %v510, %v509
    %vm512 = vcmp.ne.s32.totalorder %v511, 0
    %vm513 = vcmp.lt.s32.totalorder %v511, 0
    %vm514 = vmand %vm513, %vm512
    %v515 = vadd.s32 %v511, 4
    %v516 = vsel %vm514, %v515, %v511
    %517 = vrot.lane.b32.xlu0 %v500, 1
    %v518 = vpop.permute.xlu0 %517
    %519 = vrot.lane.b32.xlu0 %v500, 127
    %v520 = vpop.permute.xlu0 %519
    %vm521 = vcmp.ge.s32.totalorder %v516, 1
    %v522 = vmax.f32 %v500, %v518
    %v523 = vsel %vm521, 1, 0
    %vm524 = vcmp.eq.s32.totalorder %v523, 1
    %v525 = vsel %vm524, %v522, %v500
    %vm526 = vcmp.lt.s32.totalorder %v516, 3
    %v527 = vmax.f32 %v525, %v520
    %v528 = vsel %vm526, 1, 0
    %vm529 = vcmp.eq.s32.totalorder %v528, 1
    %v530 = vsel %vm529, %v527, %v525
    %531 = vrot.lane.b32.xlu0 %v500, 2
    %v532 = vpop.permute.xlu0 %531
    %533 = vrot.lane.b32.xlu0 %v500, 126
    %v534 = vpop.permute.xlu0 %533
    %vm535 = vcmp.ge.s32.totalorder %v516, 2
    %v536 = vmax.f32 %v530, %v532
    %v537 = vsel %vm535, 1, 0
    %vm538 = vcmp.eq.s32.totalorder %v537, 1
    %v539 = vsel %vm538, %v536, %v530
    %vm540 = vcmp.lt.s32.totalorder %v516, 2
    %v541 = vmax.f32 %v539, %v534
    %v542 = vsel %vm540, 1, 0
    %vm543 = vcmp.eq.s32.totalorder %v542, 1
    %v544 = vsel %vm543, %v541, %v539
    %545 = vrot.lane.b32.xlu0 %v500, 3
    %v546 = vpop.permute.xlu0 %545
    %547 = vrot.lane.b32.xlu0 %v500, 125
    %v548 = vpop.permute.xlu0 %547
    %vm549 = vcmp.ge.s32.totalorder %v516, 3
    %v550 = vmax.f32 %v544, %v546
    %v551 = vsel %vm549, 1, 0
    %vm552 = vcmp.eq.s32.totalorder %v551, 1
    %v553 = vsel %vm552, %v550, %v544
    %vm554 = vcmp.lt.s32.totalorder %v516, 1
    %v555 = vmax.f32 %v553, %v548
    %v556 = vsel %vm554, 1, 0
    %vm557 = vcmp.eq.s32.totalorder %v556, 1
    %v558 = vsel %vm557, %v555, %v553
    %v559 = vsub.f32 %v500, %v558
    %v560 = vmul.f32 %v559, 1.442695
    %v561 = vpow.pop %v560
    %562 = vrot.lane.b32.xlu0 %v561, 1
    %v563 = vpop.permute.xlu0 %562
    %564 = vrot.lane.b32.xlu0 %v561, 127
    %v565 = vpop.permute.xlu0 %564
    %v566 = vsel %vm524, %v563, 0.0
    %v567 = vadd.f32 %v561, %v566
    %v568 = vsel %vm529, %v565, 0.0
    %v569 = vadd.f32 %v567, %v568
    %570 = vrot.lane.b32.xlu0 %v561, 2
    %v571 = vpop.permute.xlu0 %570
    %572 = vrot.lane.b32.xlu0 %v561, 126
    %v573 = vpop.permute.xlu0 %572
    %v574 = vsel %vm538, %v571, 0.0
    %v575 = vadd.f32 %v569, %v574
    %v576 = vsel %vm543, %v573, 0.0
    %v577 = vadd.f32 %v575, %v576
    %578 = vrot.lane.b32.xlu0 %v561, 3
    %v579 = vpop.permute.xlu0 %578
    %580 = vrot.lane.b32.xlu0 %v561, 125
    %v581 = vpop.permute.xlu0 %580
    %v582 = vsel %vm552, %v579, 0.0
    %v583 = vadd.f32 %v577, %v582
    %v584 = vsel %vm557, %v581, 0.0
    %v585 = vadd.f32 %v583, %v584
    %v586 = vrcp.pop %v585
    %v587 = vmul.f32 %v561, %v586
    %588 = vst [vmem:[#allocation13] sm:$0x3] %v587
    // Predicated region
    $region66: #{tpu_custom_call.1} parent=1 // pred_check
      _
    $region67: #{tpu_custom_call.1} parent=1 // pred_check_branch
      %590 = sbr.rel (0) target = $region69
    $region68: #{tpu_custom_call.1} parent=1 // pred_region
      %s592 = ssub.s32 32, 32
      %593 = vsyncadd [#allocation4], %s592
      %s595 = sshll.u32 [#allocation13], 4
      %s596 = int_to_ptr.vmem [resolvable:$true] %s595
      %598 = dma.vmem_to_hbm [thread:$0]  %s596, 32, %s10, [#allocation4]
    $region69: #{tpu_custom_call.1} parent=1 // pred_fallthru
      _
    // Predicated region
    $region70: #{tpu_custom_call.1} parent=1 // pred_check
      _
    $region71: #{tpu_custom_call.1} parent=1 // pred_check_branch
      %600 = sbr.rel (0) target = $region73
    $region72: #{tpu_custom_call.1} parent=1 // pred_region
      %601 = dma.done [#allocation4], 32
    $region73: #{tpu_custom_call.1} parent=1 // pred_fallthru
      _
    %602 = vsyncpa [#allocation3], 1
    %603 = vsyncpa [#allocation6], 1
    %604 = vsyncpa [#allocation9], 1
    %605 = vsyncpa [#allocation12], 1
    %606 = vsyncpa [#allocation4], 1

</llo_original>
